<compile_context>
chip_gen: v5e
topology: v5e:2x2
jax: 0.10.0
libtpu: 0.0.40
codegen_flags: <defaults>
</compile_context>

<pallas_src>
import jax
import jax.numpy as jnp
from jax.experimental import pallas as pl
from jax.experimental.pallas import tpu as pltpu


def _transh_kernel(h_idx_ref, r_idx_ref, t_idx_ref,       # SMEM scalar-prefetch
                   ent_hbm, rel_hbm, norm_hbm,             # HBM tables (pl.ANY)
                   out_ref,                                 # (TB, 1) VMEM
                   head_buf, tail_buf, rel_buf, wvec_buf,   # (TB, D) VMEM scratch
                   sems):                                   # DMA sems (4,)
    tile = pl.program_id(0)
    tb = head_buf.shape[0]
    base = tile * tb

    def row_copies(j):
        h = h_idx_ref[base + j]
        r = r_idx_ref[base + j]
        t = t_idx_ref[base + j]
        dst = pl.ds(j, 1)
        return (
            pltpu.make_async_copy(ent_hbm.at[pl.ds(h, 1)], head_buf.at[dst], sems.at[0]),
            pltpu.make_async_copy(ent_hbm.at[pl.ds(t, 1)], tail_buf.at[dst], sems.at[1]),
            pltpu.make_async_copy(rel_hbm.at[pl.ds(r, 1)], rel_buf.at[dst], sems.at[2]),
            pltpu.make_async_copy(norm_hbm.at[pl.ds(r, 1)], wvec_buf.at[dst], sems.at[3]),
        )

    # Issue all 4*TB row gathers first (all concurrently in flight) ...
    @pl.loop(0, tb)
    def _start(j):
        for cp in row_copies(j):
            cp.start()

    # ... then wait for each one (same descriptors, shared per-stream sems).
    @pl.loop(0, tb)
    def _wait(j):
        for cp in row_copies(j):
            cp.wait()

    head = head_buf[...]            # (TB, D)
    tail = tail_buf[...]
    rel = rel_buf[...]
    w = wvec_buf[...]

    # head_proj + rel - tail_proj == (h - t) - ((h - t).w_hat) w_hat + rel
    # with w_hat = w / max(||w||, 1e-12); w_hat is never materialized:
    #   coeff = (d.w) / max(||w||^2, 1e-24)
    ss = jnp.sum(w * w, axis=-1, keepdims=True)          # (TB, 1)
    d = head - tail
    dw = jnp.sum(d * w, axis=-1, keepdims=True)          # (TB, 1)
    # exact reciprocal to stay bit-close to the torch reference
    # (pl.reciprocal(..., approx=True) is available if ~1e-3 drift is OK).
    coeff = dw * pl.reciprocal(jnp.maximum(ss, 1e-24), approx=False)
    s = d - coeff * w + rel

    # p_norm = 1 -> L1 along embedding dim; (TB, 1) score column.
    out_ref[...] = -jnp.sum(jnp.abs(s), axis=-1, keepdims=True)


def _vmem_budget_bytes():
    """Per-generation VMEM budget for the gather scratch buffers."""
    budget = 8 * 1024 * 1024          # safe everywhere (v5e 16 MiB scoped default)
    try:
        cap = int(pltpu.get_tpu_info().vmem_capacity_bytes)
        # v5e/v6e (128 MiB physical) -> 12 MiB; v7x (64 MiB physical) -> 8 MiB.
        budget = max(8 * 1024 * 1024, min(12 * 1024 * 1024, cap // 8))
    except Exception:
        pass
    return budget


def _choose_tile_b(batch, dim):
    """Batch tile: multiple of 8, sized so 4 f32 (TB, D) buffers fit the budget."""
    d_lane = ((dim + 127) // 128) * 128          # VMEM lane padding of the buffers
    per_row = 4 * d_lane * 4
    tb = _vmem_budget_bytes() // per_row
    tb = max(8, (tb // 8) * 8)
    tb = min(tb, 1024)                           # bound per-tile in-flight row DMAs
    b_pad8 = ((batch + 7) // 8) * 8
    tb = min(tb, b_pad8)
    # v7x has 2 TensorCores: keep >=2 "parallel" grid steps when the batch
    # allows so the memory-bound gather is sharded across both cores.
    if b_pad8 >= 16 and tb >= b_pad8:
        tb = max(8, ((b_pad8 // 2) // 8) * 8)
    return tb


def transh_score_fused(entity_emb, relation_emb, relation_norm, h, r, t):
    """Fused gather + TransH 'hrt' scoring. Returns (B, 1) float32."""
    B = h.shape[0]
    D = entity_emb.shape[1]
    tb = _choose_tile_b(B, D)
    num_tiles = -(-B // tb)
    b_pad = num_tiles * tb

    def pad_idx(x):
        x = x.astype(jnp.int32)
        if b_pad != B:
            # padded rows gather row 0 (always valid); their scores are sliced off
            x = jnp.pad(x, (0, b_pad - B))
        return x

    h_p, r_p, t_p = pad_idx(h), pad_idx(r), pad_idx(t)

    # Real traffic: 4 gathered rows read + 3 int32 indices read + 1 f32 score
    # written per triple (no intermediates, no transposes).
    cost = pl.CostEstimate(
        flops=int(11 * b_pad * D),
        transcendentals=int(b_pad),
        bytes_accessed=int(b_pad * (4 * D * 4 + 3 * 4 + 4)),
    )

    out = pl.pallas_call(
        _transh_kernel,
        out_shape=jax.ShapeDtypeStruct((b_pad, 1), jnp.float32),
        grid_spec=pltpu.PrefetchScalarGridSpec(
            num_scalar_prefetch=3,
            grid=(num_tiles,),
            in_specs=[
                pl.BlockSpec(memory_space=pl.ANY),   # entity_embedding  (HBM)
                pl.BlockSpec(memory_space=pl.ANY),   # relation_embedding (HBM)
                pl.BlockSpec(memory_space=pl.ANY),   # relation_norm      (HBM)
            ],
            out_specs=pl.BlockSpec((tb, 1), lambda i, hh, rr, tt: (i, 0)),
            scratch_shapes=[
                pltpu.VMEM((tb, D), jnp.float32),    # head rows
                pltpu.VMEM((tb, D), jnp.float32),    # tail rows
                pltpu.VMEM((tb, D), jnp.float32),    # relation rows
                pltpu.VMEM((tb, D), jnp.float32),    # relation_norm rows
                pltpu.SemaphoreType.DMA((4,)),       # one sem per gather stream
            ],
        ),
        compiler_params=pltpu.CompilerParams(
            dimension_semantics=("parallel",),
            vmem_limit_bytes=32 * 1024 * 1024,
        ),
        cost_estimate=cost,
    )(h_p, r_p, t_p,
      entity_emb.astype(jnp.float32),
      relation_emb.astype(jnp.float32),
      relation_norm.astype(jnp.float32))

    return out[:B]                                   # (B, 1)


_forward_jit = jax.jit(transh_score_fused)


def xavier_uniform(key, shape):
    fan_in, fan_out = shape[0], shape[1]
    bound = jnp.sqrt(6.0 / (fan_in + fan_out))
    return jax.random.uniform(key, shape, jnp.float32, -bound, bound)


class TransHJax:
    """Parameter container + forward (mode='hrt') using the fused Pallas kernel."""

    def __init__(self, n_entity, n_relation, dim, key):
        k1, k2, k3 = jax.random.split(key, 3)
        # gamma=None branch -> xavier_uniform init (deterministic via PRNGKey)
        self.entity_embedding = xavier_uniform(k1, (n_entity, dim))
        self.relation_embedding = xavier_uniform(k2, (n_relation, dim))
        self.relation_norm = xavier_uniform(k3, (n_relation, dim))
        # dropout=0 in the reference config and nn.Dropout is never applied in
        # forward -> identity; nothing to implement.

    def forward(self, h, r, t):
        # mode='hrt': per-triple scoring; embedding gathers are fused into the kernel.
        return _forward_jit(self.entity_embedding, self.relation_embedding,
                            self.relation_norm, h, r, t)


def reference_score(head, rel, wvec, tail):
    w = wvec / jnp.maximum(jnp.linalg.norm(wvec, axis=-1, keepdims=True), 1e-12)
    hp = head - jnp.sum(head * w, axis=-1, keepdims=True) * w
    tp = tail - jnp.sum(tail * w, axis=-1, keepdims=True) * w
    s = hp + rel - tp
    return -jnp.sum(jnp.abs(s), axis=-1, keepdims=True)


if __name__ == "__main__":
    n_entity, n_relation, dim, batch = 64, 8, 32, 8
    key = jax.random.PRNGKey(0)
    kp, kh, kr, kt = jax.random.split(key, 4)

    model = TransHJax(n_entity, n_relation, dim, kp)

    h = jax.random.randint(kh, (batch,), 0, n_entity, dtype=jnp.int32)
    r = jax.random.randint(kr, (batch,), 0, n_relation, dtype=jnp.int32)
    t = jax.random.randint(kt, (batch,), 0, n_entity, dtype=jnp.int32)

    out = model.forward(h, r, t)
    out = jax.block_until_ready(out)

    # sanity check against pure-JAX reference
    head = jnp.take(model.entity_embedding, h, axis=0)
    tail = jnp.take(model.entity_embedding, t, axis=0)
    rel = jnp.take(model.relation_embedding, r, axis=0)
    wvec = jnp.take(model.relation_norm, r, axis=0)
    ref = reference_score(head, rel, wvec, tail)
    assert out.shape == (batch, 1)
    assert jnp.allclose(out, ref, atol=1e-4, rtol=1e-4), (out, ref)

    print("KERNEL_OK")
</pallas_src>

<mosaic_0001>
module attributes {stable_mosaic.version = 11 : i64} {
  func.func @_transh_kernel(%arg0: i32, %arg1: memref<8xi32, #tpu.memory_space<smem>>, %arg2: memref<8xi32, #tpu.memory_space<smem>>, %arg3: memref<8xi32, #tpu.memory_space<smem>>, %arg4: memref<64x32xf32, #tpu.memory_space<any>>, %arg5: memref<8x32xf32, #tpu.memory_space<any>>, %arg6: memref<8x32xf32, #tpu.memory_space<any>>, %arg7: memref<8x1xf32, #tpu.memory_space<vmem>>, %arg8: memref<8x32xf32, #tpu.memory_space<vmem>>, %arg9: memref<8x32xf32, #tpu.memory_space<vmem>>, %arg10: memref<8x32xf32, #tpu.memory_space<vmem>>, %arg11: memref<8x32xf32, #tpu.memory_space<vmem>>, %arg12: memref<4x!tpu.dma_semaphore, #tpu.memory_space<semaphore_mem>>) attributes {dimension_semantics = [#tpu.dimension_semantics<parallel>], iteration_bounds = array<i64: 1>, scalar_prefetch = 3 : i64, scratch_operands = 5 : i64, tpu.core_type = #tpu.core_type<tc>, window_params = [{}, {}, {}, {transform_indices = @transform_3, window_bounds = array<i64: 8, 1>}]} {
    %c8_i32 = arith.constant 8 : i32
    %0 = arith.muli %arg0, %c8_i32 : i32
    %c0_i32 = arith.constant 0 : i32
    %c8_i32_0 = arith.constant 8 : i32
    %1 = arith.addi %c0_i32, %c8_i32_0 : i32
    %c1_i32 = arith.constant 1 : i32
    scf.for %arg13 = %c0_i32 to %1 step %c1_i32  : i32 {
      %c1_i32_19 = arith.constant 1 : i32
      %28 = arith.muli %arg13, %c1_i32_19 : i32
      %c0_i32_20 = arith.constant 0 : i32
      %29 = arith.addi %c0_i32_20, %28 : i32
      %30 = arith.addi %0, %29 : i32
      %31 = arith.index_cast %30 : i32 to index
      %32 = memref.load %arg1[%31] : memref<8xi32, #tpu.memory_space<smem>>
      %33 = arith.addi %0, %29 : i32
      %34 = arith.index_cast %33 : i32 to index
      %35 = memref.load %arg2[%34] : memref<8xi32, #tpu.memory_space<smem>>
      %36 = arith.addi %0, %29 : i32
      %37 = arith.index_cast %36 : i32 to index
      %38 = memref.load %arg3[%37] : memref<8xi32, #tpu.memory_space<smem>>
      %c0_i32_21 = arith.constant 0 : i32
      %c0_i32_22 = arith.constant 0 : i32
      %39 = tpu.memref_slice %arg4[%32, %c0_i32_22] : memref<64x32xf32, #tpu.memory_space<any>> -> memref<1x32xf32, #tpu.memory_space<any>>
      %c0_i32_23 = arith.constant 0 : i32
      %40 = tpu.memref_slice %arg8[%29, %c0_i32_23] : memref<8x32xf32, #tpu.memory_space<vmem>> -> memref<1x32xf32, #tpu.memory_space<vmem>>
      %41 = tpu.memref_slice %arg12[%c0_i32_21] : memref<4x!tpu.dma_semaphore, #tpu.memory_space<semaphore_mem>> -> memref<1x!tpu.dma_semaphore, #tpu.memory_space<semaphore_mem>>
      %42 = tpu.memref_squeeze %41 : memref<1x!tpu.dma_semaphore, #tpu.memory_space<semaphore_mem>> -> memref<!tpu.dma_semaphore, #tpu.memory_space<semaphore_mem>>
      tpu.enqueue_dma source(%39 : memref<1x32xf32, #tpu.memory_space<any>>) target(%40 : memref<1x32xf32, #tpu.memory_space<vmem>>) target_semaphore(%42 : memref<!tpu.dma_semaphore, #tpu.memory_space<semaphore_mem>>)
      %c1_i32_24 = arith.constant 1 : i32
      %c0_i32_25 = arith.constant 0 : i32
      %43 = tpu.memref_slice %arg4[%38, %c0_i32_25] : memref<64x32xf32, #tpu.memory_space<any>> -> memref<1x32xf32, #tpu.memory_space<any>>
      %c0_i32_26 = arith.constant 0 : i32
      %44 = tpu.memref_slice %arg9[%29, %c0_i32_26] : memref<8x32xf32, #tpu.memory_space<vmem>> -> memref<1x32xf32, #tpu.memory_space<vmem>>
      %45 = tpu.memref_slice %arg12[%c1_i32_24] : memref<4x!tpu.dma_semaphore, #tpu.memory_space<semaphore_mem>> -> memref<1x!tpu.dma_semaphore, #tpu.memory_space<semaphore_mem>>
      %46 = tpu.memref_squeeze %45 : memref<1x!tpu.dma_semaphore, #tpu.memory_space<semaphore_mem>> -> memref<!tpu.dma_semaphore, #tpu.memory_space<semaphore_mem>>
      tpu.enqueue_dma source(%43 : memref<1x32xf32, #tpu.memory_space<any>>) target(%44 : memref<1x32xf32, #tpu.memory_space<vmem>>) target_semaphore(%46 : memref<!tpu.dma_semaphore, #tpu.memory_space<semaphore_mem>>)
      %c2_i32 = arith.constant 2 : i32
      %c0_i32_27 = arith.constant 0 : i32
      %47 = tpu.memref_slice %arg5[%35, %c0_i32_27] : memref<8x32xf32, #tpu.memory_space<any>> -> memref<1x32xf32, #tpu.memory_space<any>>
      %c0_i32_28 = arith.constant 0 : i32
      %48 = tpu.memref_slice %arg10[%29, %c0_i32_28] : memref<8x32xf32, #tpu.memory_space<vmem>> -> memref<1x32xf32, #tpu.memory_space<vmem>>
      %49 = tpu.memref_slice %arg12[%c2_i32] : memref<4x!tpu.dma_semaphore, #tpu.memory_space<semaphore_mem>> -> memref<1x!tpu.dma_semaphore, #tpu.memory_space<semaphore_mem>>
      %50 = tpu.memref_squeeze %49 : memref<1x!tpu.dma_semaphore, #tpu.memory_space<semaphore_mem>> -> memref<!tpu.dma_semaphore, #tpu.memory_space<semaphore_mem>>
      tpu.enqueue_dma source(%47 : memref<1x32xf32, #tpu.memory_space<any>>) target(%48 : memref<1x32xf32, #tpu.memory_space<vmem>>) target_semaphore(%50 : memref<!tpu.dma_semaphore, #tpu.memory_space<semaphore_mem>>)
      %c3_i32 = arith.constant 3 : i32
      %c0_i32_29 = arith.constant 0 : i32
      %51 = tpu.memref_slice %arg6[%35, %c0_i32_29] : memref<8x32xf32, #tpu.memory_space<any>> -> memref<1x32xf32, #tpu.memory_space<any>>
      %c0_i32_30 = arith.constant 0 : i32
      %52 = tpu.memref_slice %arg11[%29, %c0_i32_30] : memref<8x32xf32, #tpu.memory_space<vmem>> -> memref<1x32xf32, #tpu.memory_space<vmem>>
      %53 = tpu.memref_slice %arg12[%c3_i32] : memref<4x!tpu.dma_semaphore, #tpu.memory_space<semaphore_mem>> -> memref<1x!tpu.dma_semaphore, #tpu.memory_space<semaphore_mem>>
      %54 = tpu.memref_squeeze %53 : memref<1x!tpu.dma_semaphore, #tpu.memory_space<semaphore_mem>> -> memref<!tpu.dma_semaphore, #tpu.memory_space<semaphore_mem>>
      tpu.enqueue_dma source(%51 : memref<1x32xf32, #tpu.memory_space<any>>) target(%52 : memref<1x32xf32, #tpu.memory_space<vmem>>) target_semaphore(%54 : memref<!tpu.dma_semaphore, #tpu.memory_space<semaphore_mem>>)
    }
    %c8_i32_1 = arith.constant 8 : i32
    %c0_i32_2 = arith.constant 0 : i32
    %c8_i32_3 = arith.constant 8 : i32
    %2 = arith.addi %c0_i32_2, %c8_i32_3 : i32
    %c1_i32_4 = arith.constant 1 : i32
    scf.for %arg13 = %c0_i32_2 to %2 step %c1_i32_4  : i32 {
      %c1_i32_19 = arith.constant 1 : i32
      %28 = arith.muli %arg13, %c1_i32_19 : i32
      %c0_i32_20 = arith.constant 0 : i32
      %29 = arith.addi %c0_i32_20, %28 : i32
      %30 = arith.addi %0, %29 : i32
      %31 = arith.index_cast %30 : i32 to index
      %32 = memref.load %arg1[%31] : memref<8xi32, #tpu.memory_space<smem>>
      %33 = arith.addi %0, %29 : i32
      %34 = arith.index_cast %33 : i32 to index
      %35 = memref.load %arg2[%34] : memref<8xi32, #tpu.memory_space<smem>>
      %36 = arith.addi %0, %29 : i32
      %37 = arith.index_cast %36 : i32 to index
      %38 = memref.load %arg3[%37] : memref<8xi32, #tpu.memory_space<smem>>
      %c0_i32_21 = arith.constant 0 : i32
      %c0_i32_22 = arith.constant 0 : i32
      %39 = tpu.memref_slice %arg4[%32, %c0_i32_22] : memref<64x32xf32, #tpu.memory_space<any>> -> memref<1x32xf32, #tpu.memory_space<any>>
      %c0_i32_23 = arith.constant 0 : i32
      %40 = tpu.memref_slice %arg8[%29, %c0_i32_23] : memref<8x32xf32, #tpu.memory_space<vmem>> -> memref<1x32xf32, #tpu.memory_space<vmem>>
      %41 = tpu.memref_slice %arg12[%c0_i32_21] : memref<4x!tpu.dma_semaphore, #tpu.memory_space<semaphore_mem>> -> memref<1x!tpu.dma_semaphore, #tpu.memory_space<semaphore_mem>>
      %42 = tpu.memref_squeeze %41 : memref<1x!tpu.dma_semaphore, #tpu.memory_space<semaphore_mem>> -> memref<!tpu.dma_semaphore, #tpu.memory_space<semaphore_mem>>
      tpu.wait_dma2 semaphore(%42 : memref<!tpu.dma_semaphore, #tpu.memory_space<semaphore_mem>>) src(%39 : memref<1x32xf32, #tpu.memory_space<any>>) dst(%40 : memref<1x32xf32, #tpu.memory_space<vmem>>)
      %c1_i32_24 = arith.constant 1 : i32
      %c0_i32_25 = arith.constant 0 : i32
      %43 = tpu.memref_slice %arg4[%38, %c0_i32_25] : memref<64x32xf32, #tpu.memory_space<any>> -> memref<1x32xf32, #tpu.memory_space<any>>
      %c0_i32_26 = arith.constant 0 : i32
      %44 = tpu.memref_slice %arg9[%29, %c0_i32_26] : memref<8x32xf32, #tpu.memory_space<vmem>> -> memref<1x32xf32, #tpu.memory_space<vmem>>
      %45 = tpu.memref_slice %arg12[%c1_i32_24] : memref<4x!tpu.dma_semaphore, #tpu.memory_space<semaphore_mem>> -> memref<1x!tpu.dma_semaphore, #tpu.memory_space<semaphore_mem>>
      %46 = tpu.memref_squeeze %45 : memref<1x!tpu.dma_semaphore, #tpu.memory_space<semaphore_mem>> -> memref<!tpu.dma_semaphore, #tpu.memory_space<semaphore_mem>>
      tpu.wait_dma2 semaphore(%46 : memref<!tpu.dma_semaphore, #tpu.memory_space<semaphore_mem>>) src(%43 : memref<1x32xf32, #tpu.memory_space<any>>) dst(%44 : memref<1x32xf32, #tpu.memory_space<vmem>>)
      %c2_i32 = arith.constant 2 : i32
      %c0_i32_27 = arith.constant 0 : i32
      %47 = tpu.memref_slice %arg5[%35, %c0_i32_27] : memref<8x32xf32, #tpu.memory_space<any>> -> memref<1x32xf32, #tpu.memory_space<any>>
      %c0_i32_28 = arith.constant 0 : i32
      %48 = tpu.memref_slice %arg10[%29, %c0_i32_28] : memref<8x32xf32, #tpu.memory_space<vmem>> -> memref<1x32xf32, #tpu.memory_space<vmem>>
      %49 = tpu.memref_slice %arg12[%c2_i32] : memref<4x!tpu.dma_semaphore, #tpu.memory_space<semaphore_mem>> -> memref<1x!tpu.dma_semaphore, #tpu.memory_space<semaphore_mem>>
      %50 = tpu.memref_squeeze %49 : memref<1x!tpu.dma_semaphore, #tpu.memory_space<semaphore_mem>> -> memref<!tpu.dma_semaphore, #tpu.memory_space<semaphore_mem>>
      tpu.wait_dma2 semaphore(%50 : memref<!tpu.dma_semaphore, #tpu.memory_space<semaphore_mem>>) src(%47 : memref<1x32xf32, #tpu.memory_space<any>>) dst(%48 : memref<1x32xf32, #tpu.memory_space<vmem>>)
      %c3_i32 = arith.constant 3 : i32
      %c0_i32_29 = arith.constant 0 : i32
      %51 = tpu.memref_slice %arg6[%35, %c0_i32_29] : memref<8x32xf32, #tpu.memory_space<any>> -> memref<1x32xf32, #tpu.memory_space<any>>
      %c0_i32_30 = arith.constant 0 : i32
      %52 = tpu.memref_slice %arg11[%29, %c0_i32_30] : memref<8x32xf32, #tpu.memory_space<vmem>> -> memref<1x32xf32, #tpu.memory_space<vmem>>
      %53 = tpu.memref_slice %arg12[%c3_i32] : memref<4x!tpu.dma_semaphore, #tpu.memory_space<semaphore_mem>> -> memref<1x!tpu.dma_semaphore, #tpu.memory_space<semaphore_mem>>
      %54 = tpu.memref_squeeze %53 : memref<1x!tpu.dma_semaphore, #tpu.memory_space<semaphore_mem>> -> memref<!tpu.dma_semaphore, #tpu.memory_space<semaphore_mem>>
      tpu.wait_dma2 semaphore(%54 : memref<!tpu.dma_semaphore, #tpu.memory_space<semaphore_mem>>) src(%51 : memref<1x32xf32, #tpu.memory_space<any>>) dst(%52 : memref<1x32xf32, #tpu.memory_space<vmem>>)
    }
    %c8_i32_5 = arith.constant 8 : i32
    %c0 = arith.constant 0 : index
    %c0_6 = arith.constant 0 : index
    %3 = vector.load %arg8[%c0, %c0_6] : memref<8x32xf32, #tpu.memory_space<vmem>>, vector<8x32xf32>
    %c0_7 = arith.constant 0 : index
    %c0_8 = arith.constant 0 : index
    %4 = vector.load %arg9[%c0_7, %c0_8] : memref<8x32xf32, #tpu.memory_space<vmem>>, vector<8x32xf32>
    %c0_9 = arith.constant 0 : index
    %c0_10 = arith.constant 0 : index
    %5 = vector.load %arg10[%c0_9, %c0_10] : memref<8x32xf32, #tpu.memory_space<vmem>>, vector<8x32xf32>
    %c0_11 = arith.constant 0 : index
    %c0_12 = arith.constant 0 : index
    %6 = vector.load %arg11[%c0_11, %c0_12] : memref<8x32xf32, #tpu.memory_space<vmem>>, vector<8x32xf32>
    %7 = arith.mulf %6, %6 : vector<8x32xf32>
    %cst = arith.constant dense<0.000000e+00> : vector<8xf32>
    %8 = vector.multi_reduction <add>, %7, %cst [1] : vector<8x32xf32> to vector<8xf32>
    %9 = vector.shape_cast %8 : vector<8xf32> to vector<8x1xf32>
    %10 = arith.subf %3, %4 : vector<8x32xf32>
    %11 = arith.mulf %10, %6 : vector<8x32xf32>
    %cst_13 = arith.constant dense<0.000000e+00> : vector<8xf32>
    %12 = vector.multi_reduction <add>, %11, %cst_13 [1] : vector<8x32xf32> to vector<8xf32>
    %13 = vector.shape_cast %12 : vector<8xf32> to vector<8x1xf32>
    %cst_14 = arith.constant 1.000000e-24 : f32
    %14 = vector.broadcast %cst_14 : f32 to vector<8x1xf32>
    %15 = arith.maximumf %9, %14 : vector<8x1xf32>
    %16 = tpu.reciprocal %15 : vector<8x1xf32> -> vector<8x1xf32>
    %17 = arith.mulf %13, %16 : vector<8x1xf32>
    %18 = vector.broadcast %17 : vector<8x1xf32> to vector<8x32xf32>
    %19 = arith.mulf %18, %6 : vector<8x32xf32>
    %20 = arith.subf %10, %19 : vector<8x32xf32>
    %21 = arith.addf %20, %5 : vector<8x32xf32>
    %22 = math.absf %21 : vector<8x32xf32>
    %cst_15 = arith.constant dense<0.000000e+00> : vector<8xf32>
    %23 = vector.multi_reduction <add>, %22, %cst_15 [1] : vector<8x32xf32> to vector<8xf32>
    %24 = vector.shape_cast %23 : vector<8xf32> to vector<8x1xf32>
    %cst_16 = arith.constant 0.000000e+00 : f32
    %25 = vector.broadcast %cst_16 : f32 to vector<8x1xf32>
    %26 = arith.subf %25, %24 : vector<8x1xf32>
    %c0_17 = arith.constant 0 : index
    %c0_18 = arith.constant 0 : index
    %27 = vector.load %arg7[%c0_17, %c0_18] : memref<8x1xf32, #tpu.memory_space<vmem>>, vector<8x1xf32>
    tpu.vector_store %arg7[%c0_17, %c0_18], %26 {strides = array<i32>} : memref<8x1xf32, #tpu.memory_space<vmem>>, vector<8x1xf32>,
    return
  }
  func.func @transform_3(%arg0: i32, %arg1: memref<8xi32, #tpu.memory_space<smem>>, %arg2: memref<8xi32, #tpu.memory_space<smem>>, %arg3: memref<8xi32, #tpu.memory_space<smem>>) -> (i32, i32) {
    %c0_i32 = arith.constant 0 : i32
    %c0_i32_0 = arith.constant 0 : i32
    return %arg0, %c0_i32 : i32, i32
  }
}

</mosaic_0001>

<llo_original>
// kernel: transh_score_fused.1
$region0: #{transh_score_fused.1}
  #allocation0 [shape = 'u32[]', space=smem, size = 0x4, offset = 0x4, fixed_abs, tag = 'smem constant byte address 0x4 - core index']
  #allocation1 [shape = 'u32[72,128]{1,0:T(1,128)}', space=vmem, size = 0x9000, scoped, tag = 'internal scratch']
  #allocation2 [shape = 'f32[8,32]{1,0:T(8,128)}', space=vmem, size = 0x1000, scoped, tag = 'scratch operand']
  #allocation3 [shape = 'f32[8,32]{1,0:T(8,128)}', space=vmem, size = 0x1000, scoped, tag = 'scratch operand']
  #allocation4 [shape = 'f32[8,32]{1,0:T(8,128)}', space=vmem, size = 0x1000, scoped, tag = 'scratch operand']
  #allocation5 [shape = 'f32[8,32]{1,0:T(8,128)}', space=vmem, size = 0x1000, scoped, tag = 'scratch operand']
  #allocation6 [shape = 's32[4]{0}', space=sflag, size = 0x10, scoped, tag = 'scratch operand']
  #allocation7 [shape = 's32[1]{0}', space=sflag, size = 0x4, scoped, tag = 'scoped memory for transh_score_fused.1']
  #allocation8 [shape = 'u8[512]{0}', space=smem, size = 0x200, scoped, tag = 'prefetched SMEM operand 0']
  #allocation9 [shape = 'u8[512]{0}', space=smem, size = 0x200, scoped, tag = 'prefetched SMEM operand 1']
  #allocation10 [shape = 'u8[512]{0}', space=smem, size = 0x200, scoped, tag = 'prefetched SMEM operand 2']
  #allocation11 [shape = 's32[]', space=sflag, size = 0x4, offset = 0, fixed_abs, tag = 'sflag constant byte address 0x0 - dummy sync flag']
  #allocation12 [shape = 's32[]', space=sflag, size = 0x4, offset = 0, fixed_abs, tag = 'sflag constant byte address 0x0 - dummy sync flag']
  #allocation13 [shape = 's32[]', space=sflag, size = 0x4, offset = 0, fixed_abs, tag = 'sflag constant byte address 0x0 - dummy sync flag']
  #allocation14 [shape = 's32[]', space=sflag, size = 0x4, offset = 0, fixed_abs, tag = 'sflag constant byte address 0x0 - dummy sync flag']
  %s0 = inlined_call_operand.vmem [shape: s32[8], index: 0, kind: input, shape index: {}]
  %s1 = inlined_call_operand.vmem [shape: s32[8], index: 1, kind: input, shape index: {}]
  %s2 = inlined_call_operand.vmem [shape: s32[8], index: 2, kind: input, shape index: {}]
  %s3 = inlined_call_operand.vmem [shape: f32[64,32], index: 3, kind: input, shape index: {}]
  %s4 = inlined_call_operand.vmem [shape: f32[8,32], index: 4, kind: input, shape index: {}]
  %s5 = inlined_call_operand.vmem [shape: f32[8,32], index: 5, kind: input, shape index: {}]
  %s6 = inlined_call_operand.vmem [shape: f32[8,1], index: 6, kind: output, shape index: {}]
  %s7 = sld [smem:[#allocation0]]
  $region144: #{transh_score_fused.1} parent=0
    _
  %s9 = ssub.s32 1, %s7
  %s10 = scalar_select 0, %s9, %s7
  %s12 = sshll.u32 %s0, 4
  %s13 = int_to_ptr.vmem [resolvable:$true] %s12
  %15 = dma.vmem_to_smem %s13, 16, [#allocation8], [#allocation7]
  %s17 = sshll.u32 %s1, 4
  %s18 = int_to_ptr.vmem [resolvable:$true] %s17
  %20 = dma.vmem_to_smem %s18, 16, [#allocation9], [#allocation7]
  %s22 = sshll.u32 %s2, 4
  %s23 = int_to_ptr.vmem [resolvable:$true] %s22
  %25 = dma.vmem_to_smem %s23, 16, [#allocation10], [#allocation7]
  %27 = dma.done [#allocation7], 48
  %28 = sfence
  %s29 = smul.u32 0, 8
  loop: start=0, step=1, limit=8
  $region2: #{transh_score_fused.1} parent=0 // loop_pre_header
    _
  $region3: #{transh_score_fused.1} parent=0 // loop_header
    %s31 = sphi 0, %s35
    %p32 = scmp.ge.s32.totalorder %s31, 8
  $region4: #{transh_score_fused.1} parent=0 // loop_header_branch
    %34 = sbr.rel (%p32) target = $region8
  $region5: #{transh_score_fused.1} parent=0 // loop_body
    %s36 = sadd.s32 %s29, %s31
    %s37 = sld [smem:[#allocation8 + %s36]]
    %s38 = sld [smem:[#allocation9 + %s36]]
    %s39 = sld [smem:[#allocation10 + %s36]]
    %s40 = scalar_lea.vmem %s3, %s37
    %s41 = scalar_lea.vmem [#allocation2], %s31
    // Predicated region
    $region9: #{transh_score_fused.1} parent=5 // pred_check
      _
    $region10: #{transh_score_fused.1} parent=5 // pred_check_branch
      %43 = sbr.rel target = $region12
    $region11: #{transh_score_fused.1} parent=5 // pred_region
      // Predicated region
      $region24: #{transh_score_fused.1} parent=11 // pred_check
        _
      $region25: #{transh_score_fused.1} parent=11 // pred_check_branch
        %59 = sbr.rel (0) target = $region27
      $region26: #{transh_score_fused.1} parent=11 // pred_region
        %s61 = ssub.s32 2, 1
        loop: start=0, step=1, limit=1
        $region28: #{transh_score_fused.1} parent=26 // loop_pre_header
          _
        $region29: #{transh_score_fused.1} parent=26 // loop_header
          %s63 = sphi 0, %s67
          %p64 = scmp.ge.s32.totalorder %s63, 1
          %s68 = sphi %s40, %s40
          %s69 = sphi %s41, %s41
        $region30: #{transh_score_fused.1} parent=26 // loop_header_branch
          %66 = sbr.rel (%p64) target = $region34
        $region31: #{transh_score_fused.1} parent=26 // loop_body
          %v70 = vld [vmem:[%s68] sm:%s61]
          %71 = vst [vmem:[%s69] sm:%s61] %v70
        $region32: #{transh_score_fused.1} parent=26 // loop_footer
          %s67 = sadd.s32 1, %s63
        $region33: #{transh_score_fused.1} parent=26 // loop_footer_branch
          %62 = sbr.rel target = $region29
        $region34: #{transh_score_fused.1} parent=26 // loop_exit
          _
      $region27: #{transh_score_fused.1} parent=11 // pred_fallthru
        _
    $region12: #{transh_score_fused.1} parent=5 // pred_fallthru
      _
    // Predicated region
    $region13: #{transh_score_fused.1} parent=5 // pred_check
      _
    $region14: #{transh_score_fused.1} parent=5 // pred_check_branch
      %45 = sbr.rel (0) target = $region16
    $region15: #{transh_score_fused.1} parent=5 // pred_region
      %s47 = ssub.s32 2, 1
      loop: start=0, step=1, limit=1
      $region17: #{transh_score_fused.1} parent=15 // loop_pre_header
        _
      $region18: #{transh_score_fused.1} parent=15 // loop_header
        %s49 = sphi 0, %s53
        %p50 = scmp.ge.s32.totalorder %s49, 1
        %s54 = sphi %s40, %s40
        %s55 = sphi %s41, %s41
      $region19: #{transh_score_fused.1} parent=15 // loop_header_branch
        %52 = sbr.rel (%p50) target = $region23
      $region20: #{transh_score_fused.1} parent=15 // loop_body
        %v56 = vld [vmem:[%s54] sm:%s47]
        %57 = vst [vmem:[%s55] sm:%s47] %v56
      $region21: #{transh_score_fused.1} parent=15 // loop_footer
        %s53 = sadd.s32 1, %s49
      $region22: #{transh_score_fused.1} parent=15 // loop_footer_branch
        %48 = sbr.rel target = $region18
      $region23: #{transh_score_fused.1} parent=15 // loop_exit
        _
    $region16: #{transh_score_fused.1} parent=5 // pred_fallthru
      _
    // Predicated region
    $region35: #{transh_score_fused.1} parent=5 // pred_check
      _
    $region36: #{transh_score_fused.1} parent=5 // pred_check_branch
      %74 = sbr.rel (0) target = $region38
    $region37: #{transh_score_fused.1} parent=5 // pred_region
      %75 = vsyncadd [#allocation6], 16
    $region38: #{transh_score_fused.1} parent=5 // pred_fallthru
      _
    %s76 = scalar_lea.vmem %s3, %s39
    %s77 = scalar_lea.vmem [#allocation3], %s31
    %s78 = scalar_lea.sflag [#allocation6], 1
    // Predicated region
    $region39: #{transh_score_fused.1} parent=5 // pred_check
      _
    $region40: #{transh_score_fused.1} parent=5 // pred_check_branch
      %80 = sbr.rel target = $region42
    $region41: #{transh_score_fused.1} parent=5 // pred_region
      // Predicated region
      $region54: #{transh_score_fused.1} parent=41 // pred_check
        _
      $region55: #{transh_score_fused.1} parent=41 // pred_check_branch
        %96 = sbr.rel (0) target = $region57
      $region56: #{transh_score_fused.1} parent=41 // pred_region
        %s98 = ssub.s32 2, 1
        loop: start=0, step=1, limit=1
        $region58: #{transh_score_fused.1} parent=56 // loop_pre_header
          _
        $region59: #{transh_score_fused.1} parent=56 // loop_header
          %s100 = sphi 0, %s104
          %p101 = scmp.ge.s32.totalorder %s100, 1
          %s105 = sphi %s76, %s76
          %s106 = sphi %s77, %s77
        $region60: #{transh_score_fused.1} parent=56 // loop_header_branch
          %103 = sbr.rel (%p101) target = $region64
        $region61: #{transh_score_fused.1} parent=56 // loop_body
          %v107 = vld [vmem:[%s105] sm:%s98]
          %108 = vst [vmem:[%s106] sm:%s98] %v107
        $region62: #{transh_score_fused.1} parent=56 // loop_footer
          %s104 = sadd.s32 1, %s100
        $region63: #{transh_score_fused.1} parent=56 // loop_footer_branch
          %99 = sbr.rel target = $region59
        $region64: #{transh_score_fused.1} parent=56 // loop_exit
          _
      $region57: #{transh_score_fused.1} parent=41 // pred_fallthru
        _
    $region42: #{transh_score_fused.1} parent=5 // pred_fallthru
      _
    // Predicated region
    $region43: #{transh_score_fused.1} parent=5 // pred_check
      _
    $region44: #{transh_score_fused.1} parent=5 // pred_check_branch
      %82 = sbr.rel (0) target = $region46
    $region45: #{transh_score_fused.1} parent=5 // pred_region
      %s84 = ssub.s32 2, 1
      loop: start=0, step=1, limit=1
      $region47: #{transh_score_fused.1} parent=45 // loop_pre_header
        _
      $region48: #{transh_score_fused.1} parent=45 // loop_header
        %s86 = sphi 0, %s90
        %p87 = scmp.ge.s32.totalorder %s86, 1
        %s91 = sphi %s76, %s76
        %s92 = sphi %s77, %s77
      $region49: #{transh_score_fused.1} parent=45 // loop_header_branch
        %89 = sbr.rel (%p87) target = $region53
      $region50: #{transh_score_fused.1} parent=45 // loop_body
        %v93 = vld [vmem:[%s91] sm:%s84]
        %94 = vst [vmem:[%s92] sm:%s84] %v93
      $region51: #{transh_score_fused.1} parent=45 // loop_footer
        %s90 = sadd.s32 1, %s86
      $region52: #{transh_score_fused.1} parent=45 // loop_footer_branch
        %85 = sbr.rel target = $region48
      $region53: #{transh_score_fused.1} parent=45 // loop_exit
        _
    $region46: #{transh_score_fused.1} parent=5 // pred_fallthru
      _
    // Predicated region
    $region65: #{transh_score_fused.1} parent=5 // pred_check
      _
    $region66: #{transh_score_fused.1} parent=5 // pred_check_branch
      %111 = sbr.rel (0) target = $region68
    $region67: #{transh_score_fused.1} parent=5 // pred_region
      %112 = vsyncadd %s78, 16
    $region68: #{transh_score_fused.1} parent=5 // pred_fallthru
      _
    %s113 = scalar_lea.vmem %s4, %s38
    %s114 = scalar_lea.vmem [#allocation4], %s31
    %s115 = scalar_lea.sflag [#allocation6], 2
    // Predicated region
    $region69: #{transh_score_fused.1} parent=5 // pred_check
      _
    $region70: #{transh_score_fused.1} parent=5 // pred_check_branch
      %117 = sbr.rel target = $region72
    $region71: #{transh_score_fused.1} parent=5 // pred_region
      // Predicated region
      $region84: #{transh_score_fused.1} parent=71 // pred_check
        _
      $region85: #{transh_score_fused.1} parent=71 // pred_check_branch
        %133 = sbr.rel (0) target = $region87
      $region86: #{transh_score_fused.1} parent=71 // pred_region
        %s135 = ssub.s32 2, 1
        loop: start=0, step=1, limit=1
        $region88: #{transh_score_fused.1} parent=86 // loop_pre_header
          _
        $region89: #{transh_score_fused.1} parent=86 // loop_header
          %s137 = sphi 0, %s141
          %p138 = scmp.ge.s32.totalorder %s137, 1
          %s142 = sphi %s113, %s113
          %s143 = sphi %s114, %s114
        $region90: #{transh_score_fused.1} parent=86 // loop_header_branch
          %140 = sbr.rel (%p138) target = $region94
        $region91: #{transh_score_fused.1} parent=86 // loop_body
          %v144 = vld [vmem:[%s142] sm:%s135]
          %145 = vst [vmem:[%s143] sm:%s135] %v144
        $region92: #{transh_score_fused.1} parent=86 // loop_footer
          %s141 = sadd.s32 1, %s137
        $region93: #{transh_score_fused.1} parent=86 // loop_footer_branch
          %136 = sbr.rel target = $region89
        $region94: #{transh_score_fused.1} parent=86 // loop_exit
          _
      $region87: #{transh_score_fused.1} parent=71 // pred_fallthru
        _
    $region72: #{transh_score_fused.1} parent=5 // pred_fallthru
      _
    // Predicated region
    $region73: #{transh_score_fused.1} parent=5 // pred_check
      _
    $region74: #{transh_score_fused.1} parent=5 // pred_check_branch
      %119 = sbr.rel (0) target = $region76
    $region75: #{transh_score_fused.1} parent=5 // pred_region
      %s121 = ssub.s32 2, 1
      loop: start=0, step=1, limit=1
      $region77: #{transh_score_fused.1} parent=75 // loop_pre_header
        _
      $region78: #{transh_score_fused.1} parent=75 // loop_header
        %s123 = sphi 0, %s127
        %p124 = scmp.ge.s32.totalorder %s123, 1
        %s128 = sphi %s113, %s113
        %s129 = sphi %s114, %s114
      $region79: #{transh_score_fused.1} parent=75 // loop_header_branch
        %126 = sbr.rel (%p124) target = $region83
      $region80: #{transh_score_fused.1} parent=75 // loop_body
        %v130 = vld [vmem:[%s128] sm:%s121]
        %131 = vst [vmem:[%s129] sm:%s121] %v130
      $region81: #{transh_score_fused.1} parent=75 // loop_footer
        %s127 = sadd.s32 1, %s123
      $region82: #{transh_score_fused.1} parent=75 // loop_footer_branch
        %122 = sbr.rel target = $region78
      $region83: #{transh_score_fused.1} parent=75 // loop_exit
        _
    $region76: #{transh_score_fused.1} parent=5 // pred_fallthru
      _
    // Predicated region
    $region95: #{transh_score_fused.1} parent=5 // pred_check
      _
    $region96: #{transh_score_fused.1} parent=5 // pred_check_branch
      %148 = sbr.rel (0) target = $region98
    $region97: #{transh_score_fused.1} parent=5 // pred_region
      %149 = vsyncadd %s115, 16
    $region98: #{transh_score_fused.1} parent=5 // pred_fallthru
      _
    %s150 = scalar_lea.vmem %s5, %s38
    %s151 = scalar_lea.vmem [#allocation5], %s31
    %s152 = scalar_lea.sflag [#allocation6], 3
    // Predicated region
    $region99: #{transh_score_fused.1} parent=5 // pred_check
      _
    $region100: #{transh_score_fused.1} parent=5 // pred_check_branch
      %154 = sbr.rel target = $region102
    $region101: #{transh_score_fused.1} parent=5 // pred_region
      // Predicated region
      $region114: #{transh_score_fused.1} parent=101 // pred_check
        _
      $region115: #{transh_score_fused.1} parent=101 // pred_check_branch
        %170 = sbr.rel (0) target = $region117
      $region116: #{transh_score_fused.1} parent=101 // pred_region
        %s172 = ssub.s32 2, 1
        loop: start=0, step=1, limit=1
        $region118: #{transh_score_fused.1} parent=116 // loop_pre_header
          _
        $region119: #{transh_score_fused.1} parent=116 // loop_header
          %s174 = sphi 0, %s178
          %p175 = scmp.ge.s32.totalorder %s174, 1
          %s179 = sphi %s150, %s150
          %s180 = sphi %s151, %s151
        $region120: #{transh_score_fused.1} parent=116 // loop_header_branch
          %177 = sbr.rel (%p175) target = $region124
        $region121: #{transh_score_fused.1} parent=116 // loop_body
          %v181 = vld [vmem:[%s179] sm:%s172]
          %182 = vst [vmem:[%s180] sm:%s172] %v181
        $region122: #{transh_score_fused.1} parent=116 // loop_footer
          %s178 = sadd.s32 1, %s174
        $region123: #{transh_score_fused.1} parent=116 // loop_footer_branch
          %173 = sbr.rel target = $region119
        $region124: #{transh_score_fused.1} parent=116 // loop_exit
          _
      $region117: #{transh_score_fused.1} parent=101 // pred_fallthru
        _
    $region102: #{transh_score_fused.1} parent=5 // pred_fallthru
      _
    // Predicated region
    $region103: #{transh_score_fused.1} parent=5 // pred_check
      _
    $region104: #{transh_score_fused.1} parent=5 // pred_check_branch
      %156 = sbr.rel (0) target = $region106
    $region105: #{transh_score_fused.1} parent=5 // pred_region
      %s158 = ssub.s32 2, 1
      loop: start=0, step=1, limit=1
      $region107: #{transh_score_fused.1} parent=105 // loop_pre_header
        _
      $region108: #{transh_score_fused.1} parent=105 // loop_header
        %s160 = sphi 0, %s164
        %p161 = scmp.ge.s32.totalorder %s160, 1
        %s165 = sphi %s150, %s150
        %s166 = sphi %s151, %s151
      $region109: #{transh_score_fused.1} parent=105 // loop_header_branch
        %163 = sbr.rel (%p161) target = $region113
      $region110: #{transh_score_fused.1} parent=105 // loop_body
        %v167 = vld [vmem:[%s165] sm:%s158]
        %168 = vst [vmem:[%s166] sm:%s158] %v167
      $region111: #{transh_score_fused.1} parent=105 // loop_footer
        %s164 = sadd.s32 1, %s160
      $region112: #{transh_score_fused.1} parent=105 // loop_footer_branch
        %159 = sbr.rel target = $region108
      $region113: #{transh_score_fused.1} parent=105 // loop_exit
        _
    $region106: #{transh_score_fused.1} parent=5 // pred_fallthru
      _
    // Predicated region
    $region125: #{transh_score_fused.1} parent=5 // pred_check
      _
    $region126: #{transh_score_fused.1} parent=5 // pred_check_branch
      %185 = sbr.rel (0) target = $region128
    $region127: #{transh_score_fused.1} parent=5 // pred_region
      %186 = vsyncadd %s152, 16
    $region128: #{transh_score_fused.1} parent=5 // pred_fallthru
      _
  $region6: #{transh_score_fused.1} parent=0 // loop_footer
    %s35 = sadd.s32 1, %s31
  $region7: #{transh_score_fused.1} parent=0 // loop_footer_branch
    %30 = sbr.rel target = $region3
  $region8: #{transh_score_fused.1} parent=0 // loop_exit
    _
  loop: start=0, step=1, limit=8
  $region129: #{transh_score_fused.1} parent=0 // loop_pre_header
    _
  $region130: #{transh_score_fused.1} parent=0 // loop_header
    %s188 = sphi 0, %s192
    %p189 = scmp.ge.s32.totalorder %s188, 8
  $region131: #{transh_score_fused.1} parent=0 // loop_header_branch
    %191 = sbr.rel (%p189) target = $region135
  $region132: #{transh_score_fused.1} parent=0 // loop_body
    %s193 = sadd.s32 %s29, %s188
    %s194 = sld [smem:[#allocation8 + %s193]]
    %s195 = sld [smem:[#allocation9 + %s193]]
    %s196 = sld [smem:[#allocation10 + %s193]]
    %s197 = smul.u32 1, 1
    %s198 = sshll.u32 %s197, 4
    %199 = dma.done [#allocation6], %s198
    %s200 = scalar_lea.sflag [#allocation6], 1
    %s201 = sshll.u32 %s197, 4
    %202 = dma.done %s200, %s201
    %s203 = scalar_lea.sflag [#allocation6], 2
    %s204 = sshll.u32 %s197, 4
    %205 = dma.done %s203, %s204
    %s206 = scalar_lea.sflag [#allocation6], 3
    %s207 = sshll.u32 %s197, 4
    %208 = dma.done %s206, %s207
  $region133: #{transh_score_fused.1} parent=0 // loop_footer
    %s192 = sadd.s32 1, %s188
  $region134: #{transh_score_fused.1} parent=0 // loop_footer_branch
    %187 = sbr.rel target = $region130
  $region135: #{transh_score_fused.1} parent=0 // loop_exit
    _
  %v209 = vld [vmem:[#allocation2] sm:$0xff]
  %v210 = vld [vmem:[#allocation3] sm:$0xff]
  %v211 = vld [vmem:[#allocation4] sm:$0xff]
  %v212 = vld [vmem:[#allocation5] sm:$0xff]
  %v213 = vmul.f32 %v212, %v212
  %vm214 = vcmask 261120
  %v215 = vsel %vm214, %v213, 0.0
  %216 = vadd.xlane.f32.xlu0 %v215
  %v217 = vpop.xlane.xlu0 %216
  %v218 = vsub.f32 %v209, %v210
  %v219 = vmul.f32 %v218, %v212
  %v220 = vsel %vm214, %v219, 0.0
  %221 = vadd.xlane.f32.xlu0 %v220
  %v222 = vpop.xlane.xlu0 %221
  %v223 = vmax.f32 %v217, 1e-24
  %v224 = vrcp.pop %v223
  %v225 = vmul.f32 %v223, %v224
  %v226 = vsub.f32 1.0, %v225
  %v227 = vmul.f32 %v224, %v226
  %v228 = vadd.f32 %v224, %v227
  %vm229 = vweird.f32 %v223
  %vm230 = vweird.f32 %v224
  %vm231 = vmor %vm229, %vm230
  %v232 = vsel %vm231, %v224, %v228
  %v233 = vand.u32 2147483647, %v223
  %vm234 = vcmp.eq.f32.partialorder %v233, 8.507059e+37
  %v235 = vand.u32 %v223, 2147483648
  %v236 = vor.u32 1.1754944e-38, %v235
  %v237 = vsel %vm234, %v236, %v232
  %v238 = vmul.f32 %v222, %v237
  %v239 = vmul.f32 %v238, %v212
  %v240 = vsub.f32 %v218, %v239
  %v241 = vadd.f32 %v240, %v211
  %v242 = vand.u32 2147483647, %v241
  %v243 = vsel %vm214, %v242, 0.0
  %244 = vadd.xlane.f32.xlu0 %v243
  %v245 = vpop.xlane.xlu0 %244
  %v246 = vsub.f32 0.0, %v245
  %vm247 = vcmask 7168
  %248 = vst.msk [vmem:[%s6] sm:$0xff] %vm247, %v246
  // Predicated region
  $region136: #{transh_score_fused.1} parent=0 // pred_check
    _
  $region137: #{transh_score_fused.1} parent=0 // pred_check_branch
    %250 = sbr.rel (0) target = $region139
  $region138: #{transh_score_fused.1} parent=0 // pred_region
    _
  $region139: #{transh_score_fused.1} parent=0 // pred_fallthru
    _
  // Predicated region
  $region140: #{transh_score_fused.1} parent=0 // pred_check
    _
  $region141: #{transh_score_fused.1} parent=0 // pred_check_branch
    %252 = sbr.rel (0) target = $region143
  $region142: #{transh_score_fused.1} parent=0 // pred_region
    _
  $region143: #{transh_score_fused.1} parent=0 // pred_fallthru
    _
  %253 = vsyncmov [#allocation6]
  %s254 = vpop.sfrf %253
  %p255 = scmp.eq.s32.totalorder %s254, 0
  %p256 = pneg %p255
  %258 = shalt.err (%p256)
  %s259 = scalar_lea.sflag [#allocation6], 1
  %260 = vsyncmov %s259
  %s261 = vpop.sfrf %260
  %p262 = scmp.eq.s32.totalorder %s261, 0
  %p263 = pneg %p262
  %265 = shalt.err (%p263)
  %s266 = scalar_lea.sflag [#allocation6], 2
  %267 = vsyncmov %s266
  %s268 = vpop.sfrf %267
  %p269 = scmp.eq.s32.totalorder %s268, 0
  %p270 = pneg %p269
  %272 = shalt.err (%p270)
  %s273 = scalar_lea.sflag [#allocation6], 3
  %274 = vsyncmov %s273
  %s275 = vpop.sfrf %274
  %p276 = scmp.eq.s32.totalorder %s275, 0
  %p277 = pneg %p276
  %279 = shalt.err (%p277)

</llo_original>
